<compile_context>
chip_gen: v6e
topology: v6e:2x2x1
jax: 0.10.0
libtpu: 0.0.40
codegen_flags: <defaults>
</compile_context>

<pallas_src>
import functools

import jax
import jax.numpy as jnp
from jax.experimental import pallas as pl
from jax.experimental.pallas import tpu as pltpu


# ---------------------------------------------------------------------------
# Kernel
# ---------------------------------------------------------------------------
def neuralcf_mlp_kernel(re_ref, ue_ref,
                        w1re_ref, w1ue_ref, b1_ref,
                        w2_ref, b2_ref,
                        w3_ref, b3_ref,
                        out_ref):
    # ---- lin1 over the (virtually) concatenated features ------------------
    # concat(recipe, user) @ w1  ==  recipe @ w1[:H] + user @ w1[H:]
    r1 = (jnp.dot(re_ref[...], w1re_ref[...], preferred_element_type=jnp.float32)
          + jnp.dot(ue_ref[...], w1ue_ref[...], preferred_element_type=jnp.float32)
          + b1_ref[...])
    r1 = jnp.maximum(r1, 0.0)

    # TODO(synk): Dropout(p=0.3) is identity at inference time; training-mode
    # stochastic masking (pltpu.prng_random_bits) is not implemented here.

    # ---- lin2 + ReLU -------------------------------------------------------
    r2 = jnp.dot(r1.astype(jnp.bfloat16), w2_ref[...],
                 preferred_element_type=jnp.float32) + b2_ref[...]
    r2 = jnp.maximum(r2, 0.0)

    # ---- lin3 (score head; padded to 128 lanes, real score in column 0) ---
    r3 = jnp.dot(r2.astype(jnp.bfloat16), w3_ref[...],
                 preferred_element_type=jnp.float32) + b3_ref[...]
    out_ref[...] = r3


# ---------------------------------------------------------------------------
# Wrapper
# ---------------------------------------------------------------------------
def _round_up(x, m):
    return ((x + m - 1) // m) * m


def _pad_to(x, shape):
    pads = [(0, t - s) for s, t in zip(x.shape, shape)]
    return jnp.pad(x, pads)


def neuralcf_forward(recipe_ids, user_ids, params, *, tm=1024):
    """NeuralCF_og forward pass (eval mode). Returns squeezed scores [B]."""
    # Embedding lookups (glue, plain JAX). Tables are bf16, row 0 is zero.
    recipe_emb = jnp.take(params["recipe_table"], recipe_ids, axis=0)  # [B, H] bf16
    user_emb = jnp.take(params["user_table"], user_ids, axis=0)        # [B, H] bf16

    B, H = recipe_emb.shape
    N = 128  # padded lane width for all hidden / output dims

    # Batch tiling: TM rows per grid step, batch padded up to a multiple of TM.
    TM = min(tm, _round_up(B, 8))
    Bp = pl.cdiv(B, TM) * TM
    if Bp != B:
        recipe_emb = jnp.pad(recipe_emb, ((0, Bp - B), (0, 0)))
        user_emb = jnp.pad(user_emb, ((0, Bp - B), (0, 0)))

    # Weight prep: split w1, zero-pad everything to 128 lanes, cast to bf16.
    w1, b1 = params["w1"], params["b1"]   # [2H,100], [1,100]
    w2, b2 = params["w2"], params["b2"]   # [100,50], [1,50]
    w3, b3 = params["w3"], params["b3"]   # [50,1],   [1,1]

    w1_re = _pad_to(w1[:H], (H, N)).astype(jnp.bfloat16)
    w1_ue = _pad_to(w1[H:], (H, N)).astype(jnp.bfloat16)
    b1p = _pad_to(b1, (1, N)).astype(jnp.float32)
    w2p = _pad_to(w2, (N, N)).astype(jnp.bfloat16)
    b2p = _pad_to(b2, (1, N)).astype(jnp.float32)
    w3p = _pad_to(w3, (N, N)).astype(jnp.bfloat16)
    b3p = _pad_to(b3, (1, N)).astype(jnp.float32)

    grid = (Bp // TM,)

    score = pl.pallas_call(
        neuralcf_mlp_kernel,
        out_shape=jax.ShapeDtypeStruct((Bp, N), jnp.float32),
        grid=grid,
        in_specs=[
            pl.BlockSpec((TM, H), lambda i: (i, 0)),   # recipe emb tile
            pl.BlockSpec((TM, H), lambda i: (i, 0)),   # user emb tile
            pl.BlockSpec((H, N), lambda i: (0, 0)),    # w1_re
            pl.BlockSpec((H, N), lambda i: (0, 0)),    # w1_ue
            pl.BlockSpec((1, N), lambda i: (0, 0)),    # b1
            pl.BlockSpec((N, N), lambda i: (0, 0)),    # w2
            pl.BlockSpec((1, N), lambda i: (0, 0)),    # b2
            pl.BlockSpec((N, N), lambda i: (0, 0)),    # w3
            pl.BlockSpec((1, N), lambda i: (0, 0)),    # b3
        ],
        out_specs=pl.BlockSpec((TM, N), lambda i: (i, 0)),
        compiler_params=pltpu.CompilerParams(
            dimension_semantics=("parallel",)),
    )(recipe_emb, user_emb, w1_re, w1_ue, b1p, w2p, b2p, w3p, b3p)

    # Real score lives in column 0; drop batch padding; torch.squeeze -> [B].
    return score[:B, 0]


# ---------------------------------------------------------------------------
# Params
# ---------------------------------------------------------------------------
def init_params(key, number_users, number_hstate, number_recipes):
    ks = jax.random.split(key, 8)
    H = number_hstate

    def uni(k, shape, scale):
        return jax.random.uniform(k, shape, jnp.float32, -scale, scale)

    user_table = uni(ks[0], (number_users + 1, H), 0.1)
    recipe_table = uni(ks[1], (number_recipes + 1, H), 0.1)
    # padding_idx=0 -> zero row
    user_table = user_table.at[0].set(0.0)
    recipe_table = recipe_table.at[0].set(0.0)

    w1 = uni(ks[2], (2 * H, 100), 1.0 / jnp.sqrt(2.0 * H))
    b1 = uni(ks[3], (1, 100), 1.0 / jnp.sqrt(2.0 * H))
    w2 = uni(ks[4], (100, 50), 1.0 / jnp.sqrt(100.0))
    b2 = uni(ks[5], (1, 50), 1.0 / jnp.sqrt(100.0))
    w3 = uni(ks[6], (50, 1), 1.0 / jnp.sqrt(50.0))
    b3 = uni(ks[7], (1, 1), 1.0 / jnp.sqrt(50.0))

    return {
        # store tables in bf16: halves the HBM gather + DMA traffic
        "user_table": user_table.astype(jnp.bfloat16),
        "recipe_table": recipe_table.astype(jnp.bfloat16),
        "w1": w1, "b1": b1,
        "w2": w2, "b2": b2,
        "w3": w3, "b3": b3,
    }


# ---------------------------------------------------------------------------
# Main: small deterministic test + pure-JAX reference check
# ---------------------------------------------------------------------------
if __name__ == "__main__":
    number_users = 10
    number_recipes = 20
    number_hstate = 32
    B = 8

    key = jax.random.PRNGKey(0)
    pkey, rkey, ukey = jax.random.split(key, 3)
    params = init_params(pkey, number_users, number_hstate, number_recipes)

    recipe_ids = jax.random.randint(rkey, (B,), 0, number_recipes + 1, dtype=jnp.int32)
    user_ids = jax.random.randint(ukey, (B,), 0, number_users + 1, dtype=jnp.int32)

    scores = neuralcf_forward(recipe_ids, user_ids, params)
    scores = jax.block_until_ready(scores)

    # pure-JAX f32 reference (bf16 tables upcast; weights kept f32)
    re = jnp.take(params["recipe_table"], recipe_ids, axis=0).astype(jnp.float32)
    ue = jnp.take(params["user_table"], user_ids, axis=0).astype(jnp.float32)
    feat = jnp.concatenate([re, ue], axis=1)
    ref = jnp.maximum(feat @ params["w1"] + params["b1"], 0.0)
    ref = jnp.maximum(ref @ params["w2"] + params["b2"], 0.0)
    ref = jnp.squeeze(ref @ params["w3"] + params["b3"], axis=-1)

    assert scores.shape == (B,), f"bad output shape {scores.shape}"
    # kernel runs bf16 matmuls with f32 accumulation -> small tolerance slack
    assert jnp.allclose(scores, ref, atol=2e-2, rtol=2e-2), "mismatch vs reference"

    print("KERNEL_OK")
</pallas_src>

<mosaic_0001>
module attributes {stable_mosaic.version = 11 : i64} {
  func.func @neuralcf_mlp_kernel(%arg0: i32, %arg1: memref<8x32xbf16, #tpu.memory_space<vmem>>, %arg2: memref<8x32xbf16, #tpu.memory_space<vmem>>, %arg3: memref<32x128xbf16, #tpu.memory_space<vmem>>, %arg4: memref<32x128xbf16, #tpu.memory_space<vmem>>, %arg5: memref<1x128xf32, #tpu.memory_space<vmem>>, %arg6: memref<128x128xbf16, #tpu.memory_space<vmem>>, %arg7: memref<1x128xf32, #tpu.memory_space<vmem>>, %arg8: memref<128x128xbf16, #tpu.memory_space<vmem>>, %arg9: memref<1x128xf32, #tpu.memory_space<vmem>>, %arg10: memref<8x128xf32, #tpu.memory_space<vmem>>) attributes {dimension_semantics = [#tpu.dimension_semantics<parallel>], iteration_bounds = array<i64: 1>, scalar_prefetch = 0 : i64, scratch_operands = 0 : i64, tpu.core_type = #tpu.core_type<tc>, window_params = [{transform_indices = @transform_0, window_bounds = array<i64: 8, 32>}, {transform_indices = @transform_1, window_bounds = array<i64: 8, 32>}, {pipeline_mode = #tpu.pipeline_mode<synchronous>, transform_indices = @transform_2, window_bounds = array<i64: 32, 128>}, {pipeline_mode = #tpu.pipeline_mode<synchronous>, transform_indices = @transform_3, window_bounds = array<i64: 32, 128>}, {pipeline_mode = #tpu.pipeline_mode<synchronous>, transform_indices = @transform_4, window_bounds = array<i64: 1, 128>}, {pipeline_mode = #tpu.pipeline_mode<synchronous>, transform_indices = @transform_5, window_bounds = array<i64: 128, 128>}, {pipeline_mode = #tpu.pipeline_mode<synchronous>, transform_indices = @transform_6, window_bounds = array<i64: 1, 128>}, {pipeline_mode = #tpu.pipeline_mode<synchronous>, transform_indices = @transform_7, window_bounds = array<i64: 128, 128>}, {pipeline_mode = #tpu.pipeline_mode<synchronous>, transform_indices = @transform_8, window_bounds = array<i64: 1, 128>}, {transform_indices = @transform_9, window_bounds = array<i64: 8, 128>}]} {
    %c0 = arith.constant 0 : index
    %c0_0 = arith.constant 0 : index
    %0 = vector.load %arg1[%c0, %c0_0] : memref<8x32xbf16, #tpu.memory_space<vmem>>, vector<8x32xbf16>
    %c0_1 = arith.constant 0 : index
    %c0_2 = arith.constant 0 : index
    %1 = vector.load %arg3[%c0_1, %c0_2] : memref<32x128xbf16, #tpu.memory_space<vmem>>, vector<32x128xbf16>
    %cst = arith.constant dense<0.000000e+00> : vector<8x128xf32>
    %2 = tpu.matmul %0, %1, %cst {dimension_numbers = #tpu.dot_dimension_numbers<[1], [0], [0], [1], [0, 0, 1, 1], [], []>} : vector<8x32xbf16>, vector<32x128xbf16>, vector<8x128xf32> -> vector<8x128xf32>
    %c0_3 = arith.constant 0 : index
    %c0_4 = arith.constant 0 : index
    %3 = vector.load %arg2[%c0_3, %c0_4] : memref<8x32xbf16, #tpu.memory_space<vmem>>, vector<8x32xbf16>
    %c0_5 = arith.constant 0 : index
    %c0_6 = arith.constant 0 : index
    %4 = vector.load %arg4[%c0_5, %c0_6] : memref<32x128xbf16, #tpu.memory_space<vmem>>, vector<32x128xbf16>
    %cst_7 = arith.constant dense<0.000000e+00> : vector<8x128xf32>
    %5 = tpu.matmul %3, %4, %cst_7 {dimension_numbers = #tpu.dot_dimension_numbers<[1], [0], [0], [1], [0, 0, 1, 1], [], []>} : vector<8x32xbf16>, vector<32x128xbf16>, vector<8x128xf32> -> vector<8x128xf32>
    %6 = arith.addf %2, %5 : vector<8x128xf32>
    %c0_8 = arith.constant 0 : index
    %c0_9 = arith.constant 0 : index
    %7 = vector.load %arg5[%c0_8, %c0_9] : memref<1x128xf32, #tpu.memory_space<vmem>>, vector<1x128xf32>
    %8 = vector.broadcast %7 : vector<1x128xf32> to vector<8x128xf32>
    %9 = arith.addf %6, %8 : vector<8x128xf32>
    %cst_10 = arith.constant 0.000000e+00 : f32
    %10 = vector.broadcast %cst_10 : f32 to vector<8x128xf32>
    %11 = arith.maximumf %9, %10 : vector<8x128xf32>
    %12 = arith.truncf %11 : vector<8x128xf32> to vector<8x128xbf16>
    %c0_11 = arith.constant 0 : index
    %c0_12 = arith.constant 0 : index
    %13 = vector.load %arg6[%c0_11, %c0_12] : memref<128x128xbf16, #tpu.memory_space<vmem>>, vector<128x128xbf16>
    %cst_13 = arith.constant dense<0.000000e+00> : vector<8x128xf32>
    %14 = tpu.matmul %12, %13, %cst_13 {dimension_numbers = #tpu.dot_dimension_numbers<[1], [0], [0], [1], [0, 0, 1, 1], [], []>} : vector<8x128xbf16>, vector<128x128xbf16>, vector<8x128xf32> -> vector<8x128xf32>
    %c0_14 = arith.constant 0 : index
    %c0_15 = arith.constant 0 : index
    %15 = vector.load %arg7[%c0_14, %c0_15] : memref<1x128xf32, #tpu.memory_space<vmem>>, vector<1x128xf32>
    %16 = vector.broadcast %15 : vector<1x128xf32> to vector<8x128xf32>
    %17 = arith.addf %14, %16 : vector<8x128xf32>
    %cst_16 = arith.constant 0.000000e+00 : f32
    %18 = vector.broadcast %cst_16 : f32 to vector<8x128xf32>
    %19 = arith.maximumf %17, %18 : vector<8x128xf32>
    %20 = arith.truncf %19 : vector<8x128xf32> to vector<8x128xbf16>
    %c0_17 = arith.constant 0 : index
    %c0_18 = arith.constant 0 : index
    %21 = vector.load %arg8[%c0_17, %c0_18] : memref<128x128xbf16, #tpu.memory_space<vmem>>, vector<128x128xbf16>
    %cst_19 = arith.constant dense<0.000000e+00> : vector<8x128xf32>
    %22 = tpu.matmul %20, %21, %cst_19 {dimension_numbers = #tpu.dot_dimension_numbers<[1], [0], [0], [1], [0, 0, 1, 1], [], []>} : vector<8x128xbf16>, vector<128x128xbf16>, vector<8x128xf32> -> vector<8x128xf32>
    %c0_20 = arith.constant 0 : index
    %c0_21 = arith.constant 0 : index
    %23 = vector.load %arg9[%c0_20, %c0_21] : memref<1x128xf32, #tpu.memory_space<vmem>>, vector<1x128xf32>
    %24 = vector.broadcast %23 : vector<1x128xf32> to vector<8x128xf32>
    %25 = arith.addf %22, %24 : vector<8x128xf32>
    %c0_22 = arith.constant 0 : index
    %c0_23 = arith.constant 0 : index
    %26 = vector.load %arg10[%c0_22, %c0_23] : memref<8x128xf32, #tpu.memory_space<vmem>>, vector<8x128xf32>
    tpu.vector_store %arg10[%c0_22, %c0_23], %25 {strides = array<i32>} : memref<8x128xf32, #tpu.memory_space<vmem>>, vector<8x128xf32>,
    return
  }
  func.func @transform_0(%arg0: i32) -> (i32, i32) {
    %c0_i32 = arith.constant 0 : i32
    %c0_i32_0 = arith.constant 0 : i32
    return %arg0, %c0_i32 : i32, i32
  }
  func.func @transform_1(%arg0: i32) -> (i32, i32) {
    %c0_i32 = arith.constant 0 : i32
    %c0_i32_0 = arith.constant 0 : i32
    return %arg0, %c0_i32 : i32, i32
  }
  func.func @transform_2(%arg0: i32) -> (i32, i32) {
    %c0_i32 = arith.constant 0 : i32
    %c0_i32_0 = arith.constant 0 : i32
    %c0_i32_1 = arith.constant 0 : i32
    return %c0_i32, %c0_i32_0 : i32, i32
  }
  func.func @transform_3(%arg0: i32) -> (i32, i32) {
    %c0_i32 = arith.constant 0 : i32
    %c0_i32_0 = arith.constant 0 : i32
    %c0_i32_1 = arith.constant 0 : i32
    return %c0_i32, %c0_i32_0 : i32, i32
  }
  func.func @transform_4(%arg0: i32) -> (i32, i32) {
    %c0_i32 = arith.constant 0 : i32
    %c0_i32_0 = arith.constant 0 : i32
    %c0_i32_1 = arith.constant 0 : i32
    return %c0_i32, %c0_i32_0 : i32, i32
  }
  func.func @transform_5(%arg0: i32) -> (i32, i32) {
    %c0_i32 = arith.constant 0 : i32
    %c0_i32_0 = arith.constant 0 : i32
    %c0_i32_1 = arith.constant 0 : i32
    return %c0_i32, %c0_i32_0 : i32, i32
  }
  func.func @transform_6(%arg0: i32) -> (i32, i32) {
    %c0_i32 = arith.constant 0 : i32
    %c0_i32_0 = arith.constant 0 : i32
    %c0_i32_1 = arith.constant 0 : i32
    return %c0_i32, %c0_i32_0 : i32, i32
  }
  func.func @transform_7(%arg0: i32) -> (i32, i32) {
    %c0_i32 = arith.constant 0 : i32
    %c0_i32_0 = arith.constant 0 : i32
    %c0_i32_1 = arith.constant 0 : i32
    return %c0_i32, %c0_i32_0 : i32, i32
  }
  func.func @transform_8(%arg0: i32) -> (i32, i32) {
    %c0_i32 = arith.constant 0 : i32
    %c0_i32_0 = arith.constant 0 : i32
    %c0_i32_1 = arith.constant 0 : i32
    return %c0_i32, %c0_i32_0 : i32, i32
  }
  func.func @transform_9(%arg0: i32) -> (i32, i32) {
    %c0_i32 = arith.constant 0 : i32
    %c0_i32_0 = arith.constant 0 : i32
    return %arg0, %c0_i32 : i32, i32
  }
}

</mosaic_0001>

<llo_original>
// kernel: tpu_custom_call.1
$region0: #{tpu_custom_call.1}
  #allocation0 [shape = 'u32[]', space=smem, size = 0x4, offset = 0x4, fixed_abs, tag = 'smem constant byte address 0x4 - core index']
  #allocation1 [shape = 'u32[144,128]{1,0:T(1,128)}', space=vmem, size = 0x12000, scoped, tag = 'internal scratch']
  %s0 = inlined_call_operand.hbm [shape: bf16[8,32], index: 0, kind: input, shape index: {}]
  %s1 = inlined_call_operand.hbm [shape: bf16[8,32], index: 1, kind: input, shape index: {}]
  %s2 = inlined_call_operand.hbm [shape: bf16[32,128], index: 2, kind: input, shape index: {}]
  %s3 = inlined_call_operand.hbm [shape: bf16[32,128], index: 3, kind: input, shape index: {}]
  %s4 = inlined_call_operand.vmem [shape: f32[1,128], index: 4, kind: input, shape index: {}]
  %s5 = inlined_call_operand.hbm [shape: bf16[128,128], index: 5, kind: input, shape index: {}]
  %s6 = inlined_call_operand.vmem [shape: f32[1,128], index: 6, kind: input, shape index: {}]
  %s7 = inlined_call_operand.hbm [shape: bf16[128,128], index: 7, kind: input, shape index: {}]
  %s8 = inlined_call_operand.vmem [shape: f32[1,128], index: 8, kind: input, shape index: {}]
  %s9 = inlined_call_operand.hbm [shape: f32[8,128], index: 9, kind: output, shape index: {}]
  %s10 = sld [smem:[#allocation0]]
  $region70: #{tpu_custom_call.1} parent=0
    _
  %s12 = ssub.s32 1, %s10
  %s13 = scalar_select 0, %s12, %s10
  $region1: #{tpu_custom_call.1} parent=0
    #allocation2 [shape = 'u8[2048]{0}', space=vmem, size = 0x800, scoped, tag = 'input window, operand 0, single buffered']
    #allocation3 [shape = 's32[1]{0}', space=sflag, size = 0x4, scoped, tag = 'scoped memory for tpu_custom_call.1']
    #allocation4 [shape = 's32[1]{0}', space=sflag, size = 0x4, scoped, tag = 'scoped memory for tpu_custom_call.1']
    #allocation5 [shape = 'u8[2048]{0}', space=vmem, size = 0x800, scoped, tag = 'input window, operand 1, single buffered']
    #allocation6 [shape = 's32[1]{0}', space=sflag, size = 0x4, scoped, tag = 'scoped memory for tpu_custom_call.1']
    #allocation7 [shape = 'u8[8192]{0}', space=vmem, size = 0x2000, scoped, tag = 'input window, operand 2, single buffered']
    #allocation8 [shape = 'u8[8192]{0}', space=vmem, size = 0x2000, scoped, tag = 'input window, operand 3, single buffered']
    #allocation9 [shape = 's32[1]{0}', space=sflag, size = 0x4, scoped, tag = 'scoped memory for tpu_custom_call.1']
    #allocation10 [shape = 'u8[32768]{0}', space=vmem, size = 0x8000, scoped, tag = 'input window, operand 5, single buffered']
    #allocation11 [shape = 'u8[32768]{0}', space=vmem, size = 0x8000, scoped, tag = 'input window, operand 7, single buffered']
    #allocation12 [shape = 's32[1]{0}', space=sflag, size = 0x4, scoped, tag = 'scoped memory for tpu_custom_call.1']
    #allocation13 [shape = 'u8[4096]{0}', space=vmem, size = 0x1000, scoped, tag = 'output window, operand 0, single buffered']
    %14 = vsyncpa [#allocation3], 0
    %15 = vsyncpa [#allocation6], 0
    %16 = vsyncpa [#allocation9], 0
    %17 = vsyncpa [#allocation12], 0
    %18 = vsyncpa [#allocation4], 0
    // Predicated region
    $region2: #{tpu_custom_call.1} parent=1 // pred_check
      _
    $region3: #{tpu_custom_call.1} parent=1 // pred_check_branch
      %20 = sbr.rel (0) target = $region5
    $region4: #{tpu_custom_call.1} parent=1 // pred_region
      %s22 = ssub.s32 64, 64
      %23 = vsyncadd [#allocation3], %s22
      %s25 = sshll.u32 [#allocation2], 4
      %s26 = int_to_ptr.vmem [resolvable:$true] %s25
      %28 = dma.hbm_to_vmem [thread:$0]  %s0, 64, %s26, [#allocation3]
    $region5: #{tpu_custom_call.1} parent=1 // pred_fallthru
      _
    // Predicated region
    $region6: #{tpu_custom_call.1} parent=1 // pred_check
      _
    $region7: #{tpu_custom_call.1} parent=1 // pred_check_branch
      %30 = sbr.rel (0) target = $region9
    $region8: #{tpu_custom_call.1} parent=1 // pred_region
      %s32 = ssub.s32 64, 64
      %33 = vsyncadd [#allocation6], %s32
      %s35 = sshll.u32 [#allocation5], 4
      %s36 = int_to_ptr.vmem [resolvable:$true] %s35
      %38 = dma.hbm_to_vmem [thread:$0]  %s1, 64, %s36, [#allocation6]
    $region9: #{tpu_custom_call.1} parent=1 // pred_fallthru
      _
    // Predicated region
    $region10: #{tpu_custom_call.1} parent=1 // pred_check
      _
    $region11: #{tpu_custom_call.1} parent=1 // pred_check_branch
      %40 = sbr.rel (0) target = $region13
    $region12: #{tpu_custom_call.1} parent=1 // pred_region
      %s42 = ssub.s32 256, 256
      %43 = vsyncadd [#allocation6], %s42
      %s44 = sshll.u32 [#allocation7], 4
      %s45 = int_to_ptr.vmem [resolvable:$true] %s44
      %50 = dma.hbm_to_vmem [thread:$0]  %s2, 256, %s45, [#allocation6], 64, 64, 4
    $region13: #{tpu_custom_call.1} parent=1 // pred_fallthru
      _
    // Predicated region
    $region14: #{tpu_custom_call.1} parent=1 // pred_check
      _
    $region15: #{tpu_custom_call.1} parent=1 // pred_check_branch
      %52 = sbr.rel (0) target = $region17
    $region16: #{tpu_custom_call.1} parent=1 // pred_region
      %s54 = ssub.s32 256, 256
      %55 = vsyncadd [#allocation9], %s54
      %s56 = sshll.u32 [#allocation8], 4
      %s57 = int_to_ptr.vmem [resolvable:$true] %s56
      %62 = dma.hbm_to_vmem [thread:$0]  %s3, 256, %s57, [#allocation9], 64, 64, 4
    $region17: #{tpu_custom_call.1} parent=1 // pred_fallthru
      _
    // Predicated region
    $region18: #{tpu_custom_call.1} parent=1 // pred_check
      _
    $region19: #{tpu_custom_call.1} parent=1 // pred_check_branch
      %64 = sbr.rel (0) target = $region21
    $region20: #{tpu_custom_call.1} parent=1 // pred_region
      _
    $region21: #{tpu_custom_call.1} parent=1 // pred_fallthru
      _
    // Predicated region
    $region22: #{tpu_custom_call.1} parent=1 // pred_check
      _
    $region23: #{tpu_custom_call.1} parent=1 // pred_check_branch
      %66 = sbr.rel (0) target = $region25
    $region24: #{tpu_custom_call.1} parent=1 // pred_region
      %s68 = ssub.s32 1024, 1024
      %69 = vsyncadd [#allocation9], %s68
      %s70 = sshll.u32 [#allocation10], 4
      %s71 = int_to_ptr.vmem [resolvable:$true] %s70
      %76 = dma.hbm_to_vmem [thread:$0]  %s5, 1024, %s71, [#allocation9], 64, 64, 4
    $region25: #{tpu_custom_call.1} parent=1 // pred_fallthru
      _
    // Predicated region
    $region26: #{tpu_custom_call.1} parent=1 // pred_check
      _
    $region27: #{tpu_custom_call.1} parent=1 // pred_check_branch
      %78 = sbr.rel (0) target = $region29
    $region28: #{tpu_custom_call.1} parent=1 // pred_region
      _
    $region29: #{tpu_custom_call.1} parent=1 // pred_fallthru
      _
    // Predicated region
    $region30: #{tpu_custom_call.1} parent=1 // pred_check
      _
    $region31: #{tpu_custom_call.1} parent=1 // pred_check_branch
      %80 = sbr.rel (0) target = $region33
    $region32: #{tpu_custom_call.1} parent=1 // pred_region
      %s82 = ssub.s32 1024, 1024
      %83 = vsyncadd [#allocation12], %s82
      %s84 = sshll.u32 [#allocation11], 4
      %s85 = int_to_ptr.vmem [resolvable:$true] %s84
      %90 = dma.hbm_to_vmem [thread:$0]  %s7, 1024, %s85, [#allocation12], 64, 64, 4
    $region33: #{tpu_custom_call.1} parent=1 // pred_fallthru
      _
    // Predicated region
    $region34: #{tpu_custom_call.1} parent=1 // pred_check
      _
    $region35: #{tpu_custom_call.1} parent=1 // pred_check_branch
      %92 = sbr.rel (0) target = $region37
    $region36: #{tpu_custom_call.1} parent=1 // pred_region
      _
    $region37: #{tpu_custom_call.1} parent=1 // pred_fallthru
      _
    // Predicated region
    $region38: #{tpu_custom_call.1} parent=1 // pred_check
      _
    $region39: #{tpu_custom_call.1} parent=1 // pred_check_branch
      %94 = sbr.rel (0) target = $region41
    $region40: #{tpu_custom_call.1} parent=1 // pred_region
      %95 = dma.done [#allocation3], 64
    $region41: #{tpu_custom_call.1} parent=1 // pred_fallthru
      _
    // Predicated region
    $region42: #{tpu_custom_call.1} parent=1 // pred_check
      _
    $region43: #{tpu_custom_call.1} parent=1 // pred_check_branch
      %97 = sbr.rel (0) target = $region45
    $region44: #{tpu_custom_call.1} parent=1 // pred_region
      %98 = dma.done [#allocation6], 64
    $region45: #{tpu_custom_call.1} parent=1 // pred_fallthru
      _
    // Predicated region
    $region46: #{tpu_custom_call.1} parent=1 // pred_check
      _
    $region47: #{tpu_custom_call.1} parent=1 // pred_check_branch
      %100 = sbr.rel (0) target = $region49
    $region48: #{tpu_custom_call.1} parent=1 // pred_region
      %101 = dma.done [#allocation6], 256
    $region49: #{tpu_custom_call.1} parent=1 // pred_fallthru
      _
    // Predicated region
    $region50: #{tpu_custom_call.1} parent=1 // pred_check
      _
    $region51: #{tpu_custom_call.1} parent=1 // pred_check_branch
      %103 = sbr.rel (0) target = $region53
    $region52: #{tpu_custom_call.1} parent=1 // pred_region
      %104 = dma.done [#allocation9], 256
    $region53: #{tpu_custom_call.1} parent=1 // pred_fallthru
      _
    // Predicated region
    $region54: #{tpu_custom_call.1} parent=1 // pred_check
      _
    $region55: #{tpu_custom_call.1} parent=1 // pred_check_branch
      %106 = sbr.rel (0) target = $region57
    $region56: #{tpu_custom_call.1} parent=1 // pred_region
      %107 = dma.done [#allocation9], 1024
    $region57: #{tpu_custom_call.1} parent=1 // pred_fallthru
      _
    // Predicated region
    $region58: #{tpu_custom_call.1} parent=1 // pred_check
      _
    $region59: #{tpu_custom_call.1} parent=1 // pred_check_branch
      %109 = sbr.rel (0) target = $region61
    $region60: #{tpu_custom_call.1} parent=1 // pred_region
      %110 = dma.done [#allocation12], 1024
    $region61: #{tpu_custom_call.1} parent=1 // pred_fallthru
      _
    %v112 = vld [vmem:[#allocation2] sm:$0xf]
    %v113 = vld [vmem:[#allocation7] sm:$0xf]
    %v114 = vld [vmem:[#allocation7 + $0x4] sm:$0xf]
    %v115 = vld [vmem:[#allocation7 + $0x8] sm:$0xf]
    %v116 = vld [vmem:[#allocation7 + $0xc] sm:$0xf]
    %v117 = vld [vmem:[#allocation5] sm:$0xf]
    %v118 = vld [vmem:[#allocation8] sm:$0xf]
    %v119 = vld [vmem:[#allocation8 + $0x4] sm:$0xf]
    %v120 = vld [vmem:[#allocation8 + $0x8] sm:$0xf]
    %v121 = vld [vmem:[#allocation8 + $0xc] sm:$0xf]
    %v126 = vunpack.c.l.b16 %v118
    %v127 = vunpack.c.l.b16 %v119
    %v128 = vunpack.c.l.b16 %v120
    %v129 = vunpack.c.l.b16 %v121
    %v130 = vpack.c.b16 %v127, %v126
    %v131 = vpack.c.b16 %v129, %v128
    %vm134 = vcmask 261120
    %v136 = vsel %vm134, %v117, 0
    %138 = vmatprep.subr.bf16.mxu0 0
    %139 = vmatpush1.bf16.msra.mxu0 0
    %140 = vmatprep.subr.bf16.mxu0 0
    %141 = vmatpush1.bf16.msra.mxu0 0
    %142 = vmatprep.subr.bf16.mxu0 0
    %143 = vmatpush1.bf16.msra.mxu0 0
    %144 = vmatprep.subr.bf16.mxu0 0
    %145 = vmatpush1.bf16.msra.mxu0 0
    %146 = vmatprep.subr.bf16.mxu0 0
    %147 = vmatpush1.bf16.msra.mxu0 0
    %148 = vmatprep.subr.bf16.mxu0 0
    %149 = vmatpush1.bf16.msra.mxu0 0
    %150 = vmatprep.subr.bf16.mxu0 0
    %151 = vmatpush1.bf16.msra.mxu0 %v131
    %152 = vmatprep.subr.bf16.mxu0 0
    %153 = vmatpush1.bf16.msra.mxu0 %v130
    %154 = vmatprep.subr.bf16.mxu0 0
    %155 = vmatpush2.bf16.msra.mxu0 0
    %156 = vmatprep.subr.bf16.mxu0 0
    %157 = vmatpush2.bf16.msra.mxu0 0
    %158 = vmatprep.subr.bf16.mxu0 0
    %159 = vmatpush2.bf16.msra.mxu0 0
    %160 = vmatprep.subr.bf16.mxu0 0
    %161 = vmatpush2.bf16.msra.mxu0 0
    %162 = vmatprep.subr.bf16.mxu0 0
    %163 = vmatpush2.bf16.msra.mxu0 0
    %164 = vmatprep.subr.bf16.mxu0 0
    %165 = vmatpush2.bf16.msra.mxu0 0
    %166 = vmatprep.subr.bf16.mxu0 0
    %167 = vmatpush2.bf16.msra.mxu0 0
    %168 = vmatprep.subr.bf16.mxu0 0
    %169 = vmatpush2.bf16.msra.mxu0 0
    %170 = vmatprep.mubr.bf16.mxu0 0
    %171 = vmatmul.mubr.bf16.gmra.mxu0 %v136
    %v172 = vpop.f32.mrf.mxu0
    %v173 = vadd.f32 0.0, %v172
    %v174 = vpop.f32.mrf.mxu0
    %v175 = vpop.f32.mrf.mxu0
    %v176 = vpop.f32.mrf.mxu0
    %177 = vdwg.mxu0
    %v182 = vunpack.c.l.b16 %v113
    %v183 = vunpack.c.l.b16 %v114
    %v184 = vunpack.c.l.b16 %v115
    %v185 = vunpack.c.l.b16 %v116
    %v186 = vpack.c.b16 %v183, %v182
    %v187 = vpack.c.b16 %v185, %v184
    %v191 = vsel %vm134, %v112, 0
    %193 = vmatprep.subr.bf16.mxu0 0
    %194 = vmatpush1.bf16.msra.mxu0 0
    %195 = vmatprep.subr.bf16.mxu0 0
    %196 = vmatpush1.bf16.msra.mxu0 0
    %197 = vmatprep.subr.bf16.mxu0 0
    %198 = vmatpush1.bf16.msra.mxu0 0
    %199 = vmatprep.subr.bf16.mxu0 0
    %200 = vmatpush1.bf16.msra.mxu0 0
    %201 = vmatprep.subr.bf16.mxu0 0
    %202 = vmatpush1.bf16.msra.mxu0 0
    %203 = vmatprep.subr.bf16.mxu0 0
    %204 = vmatpush1.bf16.msra.mxu0 0
    %205 = vmatprep.subr.bf16.mxu0 0
    %206 = vmatpush1.bf16.msra.mxu0 %v187
    %207 = vmatprep.subr.bf16.mxu0 0
    %208 = vmatpush1.bf16.msra.mxu0 %v186
    %209 = vmatprep.subr.bf16.mxu0 0
    %210 = vmatpush2.bf16.msra.mxu0 0
    %211 = vmatprep.subr.bf16.mxu0 0
    %212 = vmatpush2.bf16.msra.mxu0 0
    %213 = vmatprep.subr.bf16.mxu0 0
    %214 = vmatpush2.bf16.msra.mxu0 0
    %215 = vmatprep.subr.bf16.mxu0 0
    %216 = vmatpush2.bf16.msra.mxu0 0
    %217 = vmatprep.subr.bf16.mxu0 0
    %218 = vmatpush2.bf16.msra.mxu0 0
    %219 = vmatprep.subr.bf16.mxu0 0
    %220 = vmatpush2.bf16.msra.mxu0 0
    %221 = vmatprep.subr.bf16.mxu0 0
    %222 = vmatpush2.bf16.msra.mxu0 0
    %223 = vmatprep.subr.bf16.mxu0 0
    %224 = vmatpush2.bf16.msra.mxu0 0
    %225 = vmatprep.mubr.bf16.mxu0 0
    %226 = vmatmul.mubr.bf16.gmra.mxu0 %v191
    %v227 = vpop.f32.mrf.mxu0
    %v228 = vadd.f32 %v173, %v227
    %v229 = vpop.f32.mrf.mxu0
    %v230 = vpop.f32.mrf.mxu0
    %v231 = vpop.f32.mrf.mxu0
    %232 = vdwg.mxu0
    %v233 = vld [vmem:[%s4] sm:$0x1]
    %v235 = vlaneseq
    %v236 = vshrl.u32 %v235, 7
    %v237 = vsub.s32 0, %v236
    %v238 = vrot.slane %v233, %v237
    %v240 = vadd.f32 %v228, %v238
    %v241 = vmax.f32 %v240, 0.0
    %v242 = vpack.c.bf16 %v241, %v241
    %v243 = vld [vmem:[#allocation10] sm:$0xf]
    %v244 = vld [vmem:[#allocation10 + $0x4] sm:$0xf]
    %v245 = vld [vmem:[#allocation10 + $0x8] sm:$0xf]
    %v246 = vld [vmem:[#allocation10 + $0xc] sm:$0xf]
    %v247 = vld [vmem:[#allocation10 + $0x10] sm:$0xf]
    %v248 = vld [vmem:[#allocation10 + $0x14] sm:$0xf]
    %v249 = vld [vmem:[#allocation10 + $0x18] sm:$0xf]
    %v250 = vld [vmem:[#allocation10 + $0x1c] sm:$0xf]
    %v251 = vld [vmem:[#allocation10 + $0x20] sm:$0xf]
    %v252 = vld [vmem:[#allocation10 + $0x24] sm:$0xf]
    %v253 = vld [vmem:[#allocation10 + $0x28] sm:$0xf]
    %v254 = vld [vmem:[#allocation10 + $0x2c] sm:$0xf]
    %v255 = vld [vmem:[#allocation10 + $0x30] sm:$0xf]
    %v256 = vld [vmem:[#allocation10 + $0x34] sm:$0xf]
    %v257 = vld [vmem:[#allocation10 + $0x38] sm:$0xf]
    %v258 = vld [vmem:[#allocation10 + $0x3c] sm:$0xf]
    %v259 = vld [vmem:[%s6] sm:$0x1]
    %v261 = vlaneseq
    %v262 = vshrl.u32 %v261, 7
    %v263 = vsub.s32 0, %v262
    %v264 = vrot.slane %v259, %v263
    %v282 = vunpack.c.l.b16 %v243
    %v283 = vunpack.c.l.b16 %v244
    %v284 = vunpack.c.l.b16 %v245
    %v285 = vunpack.c.l.b16 %v246
    %v286 = vunpack.c.l.b16 %v247
    %v287 = vunpack.c.l.b16 %v248
    %v288 = vunpack.c.l.b16 %v249
    %v289 = vunpack.c.l.b16 %v250
    %v290 = vunpack.c.l.b16 %v251
    %v291 = vunpack.c.l.b16 %v252
    %v292 = vunpack.c.l.b16 %v253
    %v293 = vunpack.c.l.b16 %v254
    %v294 = vunpack.c.l.b16 %v255
    %v295 = vunpack.c.l.b16 %v256
    %v296 = vunpack.c.l.b16 %v257
    %v297 = vunpack.c.l.b16 %v258
    %v298 = vpack.c.b16 %v283, %v282
    %v299 = vpack.c.b16 %v285, %v284
    %v300 = vpack.c.b16 %v287, %v286
    %v301 = vpack.c.b16 %v289, %v288
    %v302 = vpack.c.b16 %v291, %v290
    %v303 = vpack.c.b16 %v293, %v292
    %v304 = vpack.c.b16 %v295, %v294
    %v305 = vpack.c.b16 %v297, %v296
    %314 = vmatprep.subr.bf16.mxu0 0
    %315 = vmatpush1.bf16.msra.mxu0 %v305
    %316 = vmatprep.subr.bf16.mxu0 0
    %317 = vmatpush1.bf16.msra.mxu0 %v304
    %318 = vmatprep.subr.bf16.mxu0 0
    %319 = vmatpush1.bf16.msra.mxu0 %v303
    %320 = vmatprep.subr.bf16.mxu0 0
    %321 = vmatpush1.bf16.msra.mxu0 %v302
    %322 = vmatprep.subr.bf16.mxu0 0
    %323 = vmatpush1.bf16.msra.mxu0 %v301
    %324 = vmatprep.subr.bf16.mxu0 0
    %325 = vmatpush1.bf16.msra.mxu0 %v300
    %326 = vmatprep.subr.bf16.mxu0 0
    %327 = vmatpush1.bf16.msra.mxu0 %v299
    %328 = vmatprep.subr.bf16.mxu0 0
    %329 = vmatpush1.bf16.msra.mxu0 %v298
    %330 = vmatprep.subr.bf16.mxu0 0
    %331 = vmatpush2.bf16.msra.mxu0 0
    %332 = vmatprep.subr.bf16.mxu0 0
    %333 = vmatpush2.bf16.msra.mxu0 0
    %334 = vmatprep.subr.bf16.mxu0 0
    %335 = vmatpush2.bf16.msra.mxu0 0
    %336 = vmatprep.subr.bf16.mxu0 0
    %337 = vmatpush2.bf16.msra.mxu0 0
    %338 = vmatprep.subr.bf16.mxu0 0
    %339 = vmatpush2.bf16.msra.mxu0 0
    %340 = vmatprep.subr.bf16.mxu0 0
    %341 = vmatpush2.bf16.msra.mxu0 0
    %342 = vmatprep.subr.bf16.mxu0 0
    %343 = vmatpush2.bf16.msra.mxu0 0
    %344 = vmatprep.subr.bf16.mxu0 0
    %345 = vmatpush2.bf16.msra.mxu0 0
    %346 = vmatprep.mubr.bf16.mxu0 0
    %347 = vmatmul.mubr.bf16.gmra.mxu0 %v242
    %v348 = vpop.f32.mrf.mxu0
    %v349 = vadd.f32 %v264, %v348
    %v350 = vpop.f32.mrf.mxu0
    %v351 = vpop.f32.mrf.mxu0
    %v352 = vpop.f32.mrf.mxu0
    %353 = vdwg.mxu0
    %v354 = vmax.f32 %v349, 0.0
    %v355 = vpack.c.bf16 %v354, %v354
    %v356 = vld [vmem:[#allocation11] sm:$0xf]
    %v357 = vld [vmem:[#allocation11 + $0x4] sm:$0xf]
    %v358 = vld [vmem:[#allocation11 + $0x8] sm:$0xf]
    %v359 = vld [vmem:[#allocation11 + $0xc] sm:$0xf]
    %v360 = vld [vmem:[#allocation11 + $0x10] sm:$0xf]
    %v361 = vld [vmem:[#allocation11 + $0x14] sm:$0xf]
    %v362 = vld [vmem:[#allocation11 + $0x18] sm:$0xf]
    %v363 = vld [vmem:[#allocation11 + $0x1c] sm:$0xf]
    %v364 = vld [vmem:[#allocation11 + $0x20] sm:$0xf]
    %v365 = vld [vmem:[#allocation11 + $0x24] sm:$0xf]
    %v366 = vld [vmem:[#allocation11 + $0x28] sm:$0xf]
    %v367 = vld [vmem:[#allocation11 + $0x2c] sm:$0xf]
    %v368 = vld [vmem:[#allocation11 + $0x30] sm:$0xf]
    %v369 = vld [vmem:[#allocation11 + $0x34] sm:$0xf]
    %v370 = vld [vmem:[#allocation11 + $0x38] sm:$0xf]
    %v371 = vld [vmem:[#allocation11 + $0x3c] sm:$0xf]
    %v372 = vld [vmem:[%s8] sm:$0x1]
    %v374 = vlaneseq
    %v375 = vshrl.u32 %v374, 7
    %v376 = vsub.s32 0, %v375
    %v377 = vrot.slane %v372, %v376
    %v395 = vunpack.c.l.b16 %v356
    %v396 = vunpack.c.l.b16 %v357
    %v397 = vunpack.c.l.b16 %v358
    %v398 = vunpack.c.l.b16 %v359
    %v399 = vunpack.c.l.b16 %v360
    %v400 = vunpack.c.l.b16 %v361
    %v401 = vunpack.c.l.b16 %v362
    %v402 = vunpack.c.l.b16 %v363
    %v403 = vunpack.c.l.b16 %v364
    %v404 = vunpack.c.l.b16 %v365
    %v405 = vunpack.c.l.b16 %v366
    %v406 = vunpack.c.l.b16 %v367
    %v407 = vunpack.c.l.b16 %v368
    %v408 = vunpack.c.l.b16 %v369
    %v409 = vunpack.c.l.b16 %v370
    %v410 = vunpack.c.l.b16 %v371
    %v411 = vpack.c.b16 %v396, %v395
    %v412 = vpack.c.b16 %v398, %v397
    %v413 = vpack.c.b16 %v400, %v399
    %v414 = vpack.c.b16 %v402, %v401
    %v415 = vpack.c.b16 %v404, %v403
    %v416 = vpack.c.b16 %v406, %v405
    %v417 = vpack.c.b16 %v408, %v407
    %v418 = vpack.c.b16 %v410, %v409
    %427 = vmatprep.subr.bf16.mxu0 0
    %428 = vmatpush1.bf16.msra.mxu0 %v418
    %429 = vmatprep.subr.bf16.mxu0 0
    %430 = vmatpush1.bf16.msra.mxu0 %v417
    %431 = vmatprep.subr.bf16.mxu0 0
    %432 = vmatpush1.bf16.msra.mxu0 %v416
    %433 = vmatprep.subr.bf16.mxu0 0
    %434 = vmatpush1.bf16.msra.mxu0 %v415
    %435 = vmatprep.subr.bf16.mxu0 0
    %436 = vmatpush1.bf16.msra.mxu0 %v414
    %437 = vmatprep.subr.bf16.mxu0 0
    %438 = vmatpush1.bf16.msra.mxu0 %v413
    %439 = vmatprep.subr.bf16.mxu0 0
    %440 = vmatpush1.bf16.msra.mxu0 %v412
    %441 = vmatprep.subr.bf16.mxu0 0
    %442 = vmatpush1.bf16.msra.mxu0 %v411
    %443 = vmatprep.subr.bf16.mxu0 0
    %444 = vmatpush2.bf16.msra.mxu0 0
    %445 = vmatprep.subr.bf16.mxu0 0
    %446 = vmatpush2.bf16.msra.mxu0 0
    %447 = vmatprep.subr.bf16.mxu0 0
    %448 = vmatpush2.bf16.msra.mxu0 0
    %449 = vmatprep.subr.bf16.mxu0 0
    %450 = vmatpush2.bf16.msra.mxu0 0
    %451 = vmatprep.subr.bf16.mxu0 0
    %452 = vmatpush2.bf16.msra.mxu0 0
    %453 = vmatprep.subr.bf16.mxu0 0
    %454 = vmatpush2.bf16.msra.mxu0 0
    %455 = vmatprep.subr.bf16.mxu0 0
    %456 = vmatpush2.bf16.msra.mxu0 0
    %457 = vmatprep.subr.bf16.mxu0 0
    %458 = vmatpush2.bf16.msra.mxu0 0
    %459 = vmatprep.mubr.bf16.mxu0 0
    %460 = vmatmul.mubr.bf16.gmra.mxu0 %v355
    %v461 = vpop.f32.mrf.mxu0
    %v462 = vadd.f32 %v377, %v461
    %v463 = vpop.f32.mrf.mxu0
    %v464 = vpop.f32.mrf.mxu0
    %v465 = vpop.f32.mrf.mxu0
    %466 = vdwg.mxu0
    %467 = vst [vmem:[#allocation13] sm:$0xff] %v462
    // Predicated region
    $region62: #{tpu_custom_call.1} parent=1 // pred_check
      _
    $region63: #{tpu_custom_call.1} parent=1 // pred_check_branch
      %469 = sbr.rel (0) target = $region65
    $region64: #{tpu_custom_call.1} parent=1 // pred_region
      %s471 = ssub.s32 128, 128
      %472 = vsyncadd [#allocation4], %s471
      %s474 = sshll.u32 [#allocation13], 4
      %s475 = int_to_ptr.vmem [resolvable:$true] %s474
      %477 = dma.vmem_to_hbm [thread:$0]  %s475, 128, %s9, [#allocation4]
    $region65: #{tpu_custom_call.1} parent=1 // pred_fallthru
      _
    // Predicated region
    $region66: #{tpu_custom_call.1} parent=1 // pred_check
      _
    $region67: #{tpu_custom_call.1} parent=1 // pred_check_branch
      %479 = sbr.rel (0) target = $region69
    $region68: #{tpu_custom_call.1} parent=1 // pred_region
      %480 = dma.done [#allocation4], 128
    $region69: #{tpu_custom_call.1} parent=1 // pred_fallthru
      _
    %481 = vsyncpa [#allocation3], 1
    %482 = vsyncpa [#allocation6], 1
    %483 = vsyncpa [#allocation9], 1
    %484 = vsyncpa [#allocation12], 1
    %485 = vsyncpa [#allocation4], 1

</llo_original>
